<compile_context>
chip_gen: v7x
topology: tpu7x:2x2x1
jax: 0.10.0
libtpu: 0.0.40
codegen_flags: <defaults>
</compile_context>

<pallas_src>
import functools

import jax
import jax.numpy as jnp
from jax import lax
from jax.experimental import pallas as pl
from jax.experimental.pallas import tpu as pltpu


def _hash_u32(x):
    # lowbias32 integer hash — pure VPU 32-bit ops (no TPU-only PRNG primitives).
    x = x ^ (x >> jnp.uint32(16))
    x = x * jnp.uint32(0x7FEB352D)
    x = x ^ (x >> jnp.uint32(15))
    x = x * jnp.uint32(0x846CA68B)
    x = x ^ (x >> jnp.uint32(16))
    return x


def _residual_kernel(seed_ref, alpha_ref, beta_ref, x_ref, w_ref, b_ref,
                     out_ref, *, dropout_p: float, eps: float):
    x = x_ref[...].astype(jnp.float32)                       # (TR, D)
    rows, cols = x.shape

    # --- LayerNormalization (torch.std: unbiased /(D-1); eps added to std) ---
    mean = jnp.mean(x, axis=-1, keepdims=True)
    diff = x - mean
    var_unbiased = jnp.sum(diff * diff, axis=-1, keepdims=True) / (cols - 1)
    std = jnp.sqrt(var_unbiased)
    # Fold alpha into a per-row scale: one (TR,1) divide, then a single
    # (TR,D) multiply-add instead of divide + multiply on the VALU path.
    scale = alpha_ref[0] / (std + eps)                        # (TR, 1)
    normed = diff * scale + beta_ref[0]

    # --- representative dense sublayer: bf16 MXU inputs, f32 accumulation ---
    # TODO(synk): the PyTorch module takes `sublayer` as an arbitrary callable;
    # a dense projection is fused here as a representative sublayer.
    y = jnp.dot(normed.astype(w_ref.dtype), w_ref[...],
                preferred_element_type=jnp.float32) + b_ref[...]

    # --- dropout (train-mode nn.Dropout, inverted scaling) ---
    if dropout_p > 0.0:
        keep_scale = jnp.float32(1.0 / (1.0 - dropout_p))
        tile = pl.program_id(0)
        row_idx = lax.broadcasted_iota(jnp.int32, (rows, cols), 0)
        col_idx = lax.broadcasted_iota(jnp.int32, (rows, cols), 1)
        g_row = (row_idx + tile * rows).astype(jnp.uint32)
        elem = g_row * jnp.uint32(cols) + col_idx.astype(jnp.uint32)
        # golden-ratio seed mixing done in int32 scalar math (wraps), then u32.
        seed_mix = (seed_ref[0] * jnp.int32(-1640531527)).astype(jnp.uint32)
        bits = _hash_u32(elem + seed_mix)
        bits_i32 = lax.bitcast_convert_type(bits, jnp.int32)
        r = lax.shift_right_logical(bits_i32, 8)              # in [0, 2^24)
        u = r.astype(jnp.float32) * jnp.float32(1.0 / (1 << 24))
        y = jnp.where(u >= jnp.float32(dropout_p), y * keep_scale, 0.0)

    # --- residual add ---
    out_ref[...] = (x + y).astype(out_ref.dtype)


def residual_connection(x, w, b, alpha, beta, seed, *, dropout_p: float,
                        eps: float = 1e-6):
    """x: (B, S, D); w: (D, D); b: (D,); alpha/beta: (1,); seed: (1,) int32."""
    assert 0.0 <= dropout_p < 1.0, "dropout_p must be in [0, 1)"
    B, S, D = x.shape
    R = B * S
    x2 = x.reshape(R, D)
    w_lo = w.astype(jnp.bfloat16)                 # halve resident-W footprint
    b2 = b.reshape(1, D).astype(jnp.float32)

    # Row tile: large for pipelining; second-to-last dim multiple of 8 (f32)
    # unless it is the full extent.
    TR = 512 if R > 512 else R
    num_tiles = pl.cdiv(R, TR)

    # VMEM budget: resident bf16 W + bias, double-buffered x/out tiles, headroom.
    itemsize = jnp.dtype(x.dtype).itemsize
    vmem_bytes = int(w_lo.size * 2 + D * 4
                     + 2 * TR * D * itemsize          # x double buffer
                     + 2 * TR * D * itemsize          # out double buffer
                     + (8 << 20))
    vmem_bytes = min(vmem_bytes, 100 << 20)

    kernel = functools.partial(_residual_kernel,
                               dropout_p=float(dropout_p), eps=float(eps))
    out = pl.pallas_call(
        kernel,
        grid=(num_tiles,),
        out_shape=jax.ShapeDtypeStruct((R, D), x.dtype),
        in_specs=[
            pl.BlockSpec(memory_space=pltpu.MemorySpace.SMEM),   # seed  (1,)
            pl.BlockSpec(memory_space=pltpu.MemorySpace.SMEM),   # alpha (1,)
            pl.BlockSpec(memory_space=pltpu.MemorySpace.SMEM),   # beta  (1,)
            pl.BlockSpec((TR, D), lambda i: (i, 0)),             # x tile
            pl.BlockSpec((D, D), lambda i: (0, 0)),              # W resident
            pl.BlockSpec((1, D), lambda i: (0, 0)),              # bias resident
        ],
        out_specs=pl.BlockSpec((TR, D), lambda i: (i, 0)),
        compiler_params=pltpu.CompilerParams(
            dimension_semantics=("parallel",),
            vmem_limit_bytes=vmem_bytes),
    )(seed, alpha, beta, x2, w_lo, b2)
    return out.reshape(B, S, D)


def _reference_no_dropout(x, w, b, alpha, beta, eps=1e-6):
    xf = x.astype(jnp.float32)
    mean = xf.mean(-1, keepdims=True)
    diff = xf - mean
    std = jnp.sqrt((diff * diff).sum(-1, keepdims=True) / (x.shape[-1] - 1))
    normed = alpha[0] * diff / (std + eps) + beta[0]
    y = jnp.dot(normed.astype(jnp.bfloat16), w.astype(jnp.bfloat16),
                preferred_element_type=jnp.float32) + b
    return (xf + y).astype(x.dtype)


if __name__ == "__main__":
    B, S, D = 2, 8, 32
    key = jax.random.PRNGKey(0)
    kx, kw, kb = jax.random.split(key, 3)

    x = jax.random.normal(kx, (B, S, D), dtype=jnp.float32)
    # Deterministic "sublayer" parameters (synthetic init, no checkpoint).
    w = jax.random.normal(kw, (D, D), dtype=jnp.float32) * 0.05
    b = jax.random.normal(kb, (D,), dtype=jnp.float32) * 0.01
    # LayerNormalization params: alpha=ones(1), bias=zeros(1) as in __init__.
    alpha = jnp.ones((1,), dtype=jnp.float32)
    beta = jnp.zeros((1,), dtype=jnp.float32)
    seed = jnp.array([0], dtype=jnp.int32)

    # Correctness check with dropout disabled (deterministic path).
    out_nodrop = residual_connection(x, w, b, alpha, beta, seed, dropout_p=0.0)
    jax.block_until_ready(out_nodrop)
    ref = _reference_no_dropout(x, w, b, alpha, beta)
    assert jnp.allclose(out_nodrop, ref, atol=2e-2, rtol=2e-2), (
        "mismatch vs reference")

    # Run once with dropout active (train-mode nn.Dropout semantics).
    out = residual_connection(x, w, b, alpha, beta, seed, dropout_p=0.1)
    jax.block_until_ready(out)
    assert bool(jnp.all(jnp.isfinite(out)))

    print("KERNEL_OK")
</pallas_src>

<mosaic_0001>
module attributes {stable_mosaic.version = 11 : i64} {
  func.func @_residual_kernel(%arg0: i32, %arg1: memref<1xi32, #tpu.memory_space<smem>>, %arg2: memref<1xf32, #tpu.memory_space<smem>>, %arg3: memref<1xf32, #tpu.memory_space<smem>>, %arg4: memref<16x32xf32, #tpu.memory_space<vmem>>, %arg5: memref<32x32xbf16, #tpu.memory_space<vmem>>, %arg6: memref<1x32xf32, #tpu.memory_space<vmem>>, %arg7: memref<16x32xf32, #tpu.memory_space<vmem>>) attributes {dimension_semantics = [#tpu.dimension_semantics<parallel>], iteration_bounds = array<i64: 1>, scalar_prefetch = 0 : i64, scratch_operands = 0 : i64, tpu.core_type = #tpu.core_type<tc>, window_params = [{transform_indices = @transform_0, window_bounds = array<i64: 1>}, {transform_indices = @transform_1, window_bounds = array<i64: 1>}, {transform_indices = @transform_2, window_bounds = array<i64: 1>}, {transform_indices = @transform_3, window_bounds = array<i64: 16, 32>}, {pipeline_mode = #tpu.pipeline_mode<synchronous>, transform_indices = @transform_4, window_bounds = array<i64: 32, 32>}, {pipeline_mode = #tpu.pipeline_mode<synchronous>, transform_indices = @transform_5, window_bounds = array<i64: 1, 32>}, {transform_indices = @transform_6, window_bounds = array<i64: 16, 32>}]} {
    %c0 = arith.constant 0 : index
    %c0_0 = arith.constant 0 : index
    %0 = vector.load %arg4[%c0, %c0_0] : memref<16x32xf32, #tpu.memory_space<vmem>>, vector<16x32xf32>
    %cst = arith.constant dense<0.000000e+00> : vector<16xf32>
    %1 = vector.multi_reduction <add>, %0, %cst [1] : vector<16x32xf32> to vector<16xf32>
    %2 = vector.shape_cast %1 : vector<16xf32> to vector<16x1xf32>
    %cst_1 = arith.constant 3.200000e+01 : f32
    %3 = vector.broadcast %cst_1 : f32 to vector<16x1xf32>
    %4 = arith.divf %2, %3 : vector<16x1xf32>
    %5 = vector.broadcast %4 : vector<16x1xf32> to vector<16x32xf32>
    %6 = arith.subf %0, %5 : vector<16x32xf32>
    %7 = arith.mulf %6, %6 : vector<16x32xf32>
    %cst_2 = arith.constant dense<0.000000e+00> : vector<16xf32>
    %8 = vector.multi_reduction <add>, %7, %cst_2 [1] : vector<16x32xf32> to vector<16xf32>
    %9 = vector.shape_cast %8 : vector<16xf32> to vector<16x1xf32>
    %cst_3 = arith.constant 3.100000e+01 : f32
    %10 = vector.broadcast %cst_3 : f32 to vector<16x1xf32>
    %11 = arith.divf %9, %10 : vector<16x1xf32>
    %12 = math.sqrt %11 : vector<16x1xf32>
    %c0_4 = arith.constant 0 : index
    %13 = memref.load %arg2[%c0_4] : memref<1xf32, #tpu.memory_space<smem>>
    %cst_5 = arith.constant 9.99999997E-7 : f32
    %14 = vector.broadcast %cst_5 : f32 to vector<16x1xf32>
    %15 = arith.addf %12, %14 : vector<16x1xf32>
    %16 = vector.broadcast %13 : f32 to vector<16x1xf32>
    %17 = arith.divf %16, %15 : vector<16x1xf32>
    %18 = vector.broadcast %17 : vector<16x1xf32> to vector<16x32xf32>
    %19 = arith.mulf %6, %18 : vector<16x32xf32>
    %c0_6 = arith.constant 0 : index
    %20 = memref.load %arg3[%c0_6] : memref<1xf32, #tpu.memory_space<smem>>
    %21 = vector.broadcast %20 : f32 to vector<16x32xf32>
    %22 = arith.addf %19, %21 : vector<16x32xf32>
    %23 = arith.truncf %22 : vector<16x32xf32> to vector<16x32xbf16>
    %c0_7 = arith.constant 0 : index
    %c0_8 = arith.constant 0 : index
    %24 = vector.load %arg5[%c0_7, %c0_8] : memref<32x32xbf16, #tpu.memory_space<vmem>>, vector<32x32xbf16>
    %cst_9 = arith.constant dense<0.000000e+00> : vector<16x32xf32>
    %25 = tpu.matmul %23, %24, %cst_9 {dimension_numbers = #tpu.dot_dimension_numbers<[1], [0], [0], [1], [0, 0, 1, 1], [], []>} : vector<16x32xbf16>, vector<32x32xbf16>, vector<16x32xf32> -> vector<16x32xf32>
    %c0_10 = arith.constant 0 : index
    %c0_11 = arith.constant 0 : index
    %26 = vector.load %arg6[%c0_10, %c0_11] : memref<1x32xf32, #tpu.memory_space<vmem>>, vector<1x32xf32>
    %27 = vector.broadcast %26 : vector<1x32xf32> to vector<16x32xf32>
    %28 = arith.addf %25, %27 : vector<16x32xf32>
    %29 = arith.addf %0, %28 : vector<16x32xf32>
    %c0_12 = arith.constant 0 : index
    %c0_13 = arith.constant 0 : index
    %30 = vector.load %arg7[%c0_12, %c0_13] : memref<16x32xf32, #tpu.memory_space<vmem>>, vector<16x32xf32>
    tpu.vector_store %arg7[%c0_12, %c0_13], %29 {strides = array<i32>} : memref<16x32xf32, #tpu.memory_space<vmem>>, vector<16x32xf32>,
    return
  }
  func.func @transform_0(%arg0: i32) -> i32 {
    %c0_i32 = arith.constant 0 : i32
    %c0_i32_0 = arith.constant 0 : i32
    return %c0_i32 : i32
  }
  func.func @transform_1(%arg0: i32) -> i32 {
    %c0_i32 = arith.constant 0 : i32
    %c0_i32_0 = arith.constant 0 : i32
    return %c0_i32 : i32
  }
  func.func @transform_2(%arg0: i32) -> i32 {
    %c0_i32 = arith.constant 0 : i32
    %c0_i32_0 = arith.constant 0 : i32
    return %c0_i32 : i32
  }
  func.func @transform_3(%arg0: i32) -> (i32, i32) {
    %c0_i32 = arith.constant 0 : i32
    %c0_i32_0 = arith.constant 0 : i32
    return %arg0, %c0_i32 : i32, i32
  }
  func.func @transform_4(%arg0: i32) -> (i32, i32) {
    %c0_i32 = arith.constant 0 : i32
    %c0_i32_0 = arith.constant 0 : i32
    %c0_i32_1 = arith.constant 0 : i32
    return %c0_i32, %c0_i32_0 : i32, i32
  }
  func.func @transform_5(%arg0: i32) -> (i32, i32) {
    %c0_i32 = arith.constant 0 : i32
    %c0_i32_0 = arith.constant 0 : i32
    %c0_i32_1 = arith.constant 0 : i32
    return %c0_i32, %c0_i32_0 : i32, i32
  }
  func.func @transform_6(%arg0: i32) -> (i32, i32) {
    %c0_i32 = arith.constant 0 : i32
    %c0_i32_0 = arith.constant 0 : i32
    return %arg0, %c0_i32 : i32, i32
  }
}

</mosaic_0001>

<llo_original>
// kernel: tpu_custom_call.1
$region0: #{tpu_custom_call.1}
  #allocation0 [shape = 'u32[]', space=smem, size = 0x4, offset = 0x4, fixed_abs, tag = 'smem constant byte address 0x4 - core index']
  #allocation1 [shape = 'u32[144,128]{1,0:T(1,128)}', space=vmem, size = 0x12000, scoped, tag = 'internal scratch']
  #allocation2 [shape = 's32[1]{0:T(128)S(6)}', space=smem, size = 0x200, scoped, tag = 'scoped memory for tpu_custom_call.1']
  #allocation3 [shape = 'f32[1]{0:T(128)S(6)}', space=smem, size = 0x200, scoped, tag = 'scoped memory for tpu_custom_call.1']
  #allocation4 [shape = 'f32[1]{0:T(128)S(6)}', space=smem, size = 0x200, scoped, tag = 'scoped memory for tpu_custom_call.1']
  %s0 = inlined_call_operand.<no memory space> [shape: s32[1], index: 0, kind: input, shape index: {}]
  %s1 = inlined_call_operand.<no memory space> [shape: f32[1], index: 1, kind: input, shape index: {}]
  %s2 = inlined_call_operand.<no memory space> [shape: f32[1], index: 2, kind: input, shape index: {}]
  %s3 = inlined_call_operand.hbm [shape: f32[16,32], index: 3, kind: input, shape index: {}]
  %s4 = inlined_call_operand.hbm [shape: bf16[32,32], index: 4, kind: input, shape index: {}]
  %s5 = inlined_call_operand.vmem [shape: f32[1,32], index: 5, kind: input, shape index: {}]
  %s6 = inlined_call_operand.hbm [shape: f32[16,32], index: 6, kind: output, shape index: {}]
  %s7 = sld [smem:[#allocation0]]
  $region42: #{tpu_custom_call.1} parent=0
    _
  %s9 = ssub.s32 1, %s7
  %s10 = scalar_select 0, %s9, %s7
  %11 = sst [smem:[#allocation2]] %s0
  %12 = sst [smem:[#allocation3]] %s1
  %13 = sst [smem:[#allocation4]] %s2
  $region1: #{tpu_custom_call.1} parent=0
    #allocation5 [shape = 'u8[8192]{0}', space=vmem, size = 0x2000, scoped, tag = 'input window, operand 3, single buffered']
    #allocation6 [shape = 's32[1]{0}', space=sflag, size = 0x4, scoped, tag = 'scoped memory for tpu_custom_call.1']
    #allocation7 [shape = 's32[1]{0}', space=sflag, size = 0x4, scoped, tag = 'scoped memory for tpu_custom_call.1']
    #allocation8 [shape = 'u8[8192]{0}', space=vmem, size = 0x2000, scoped, tag = 'input window, operand 4, single buffered']
    #allocation9 [shape = 's32[1]{0}', space=sflag, size = 0x4, scoped, tag = 'scoped memory for tpu_custom_call.1']
    #allocation10 [shape = 'u8[8192]{0}', space=vmem, size = 0x2000, scoped, tag = 'output window, operand 0, single buffered']
    %14 = vsyncpa [#allocation6], 0
    %15 = vsyncpa [#allocation9], 0
    %16 = vsyncpa [#allocation7], 0
    // Predicated region
    $region2: #{tpu_custom_call.1} parent=1 // pred_check
      _
    $region3: #{tpu_custom_call.1} parent=1 // pred_check_branch
      %18 = sbr.rel (0) target = $region5
    $region4: #{tpu_custom_call.1} parent=1 // pred_region
      _
    $region5: #{tpu_custom_call.1} parent=1 // pred_fallthru
      _
    // Predicated region
    $region6: #{tpu_custom_call.1} parent=1 // pred_check
      _
    $region7: #{tpu_custom_call.1} parent=1 // pred_check_branch
      %20 = sbr.rel (0) target = $region9
    $region8: #{tpu_custom_call.1} parent=1 // pred_region
      _
    $region9: #{tpu_custom_call.1} parent=1 // pred_fallthru
      _
    // Predicated region
    $region10: #{tpu_custom_call.1} parent=1 // pred_check
      _
    $region11: #{tpu_custom_call.1} parent=1 // pred_check_branch
      %22 = sbr.rel (0) target = $region13
    $region12: #{tpu_custom_call.1} parent=1 // pred_region
      _
    $region13: #{tpu_custom_call.1} parent=1 // pred_fallthru
      _
    // Predicated region
    $region14: #{tpu_custom_call.1} parent=1 // pred_check
      _
    $region15: #{tpu_custom_call.1} parent=1 // pred_check_branch
      %24 = sbr.rel (0) target = $region17
    $region16: #{tpu_custom_call.1} parent=1 // pred_region
      %s26 = ssub.s32 256, 256
      %27 = vsyncadd [#allocation6], %s26
      %s28 = sshll.u32 [#allocation5], 4
      %s29 = int_to_ptr.vmem [resolvable:$true] %s28
      %34 = dma.hbm_to_vmem [thread:$0]  %s3, 256, %s29, [#allocation6], 128, 128, 8
    $region17: #{tpu_custom_call.1} parent=1 // pred_fallthru
      _
    // Predicated region
    $region18: #{tpu_custom_call.1} parent=1 // pred_check
      _
    $region19: #{tpu_custom_call.1} parent=1 // pred_check_branch
      %36 = sbr.rel (0) target = $region21
    $region20: #{tpu_custom_call.1} parent=1 // pred_region
      %s38 = ssub.s32 256, 256
      %39 = vsyncadd [#allocation9], %s38
      %s40 = sshll.u32 [#allocation8], 4
      %s41 = int_to_ptr.vmem [resolvable:$true] %s40
      %46 = dma.hbm_to_vmem [thread:$0]  %s4, 256, %s41, [#allocation9], 64, 64, 4
    $region21: #{tpu_custom_call.1} parent=1 // pred_fallthru
      _
    // Predicated region
    $region22: #{tpu_custom_call.1} parent=1 // pred_check
      _
    $region23: #{tpu_custom_call.1} parent=1 // pred_check_branch
      %48 = sbr.rel (0) target = $region25
    $region24: #{tpu_custom_call.1} parent=1 // pred_region
      _
    $region25: #{tpu_custom_call.1} parent=1 // pred_fallthru
      _
    // Predicated region
    $region26: #{tpu_custom_call.1} parent=1 // pred_check
      _
    $region27: #{tpu_custom_call.1} parent=1 // pred_check_branch
      %50 = sbr.rel (0) target = $region29
    $region28: #{tpu_custom_call.1} parent=1 // pred_region
      %51 = dma.done [#allocation6], 256
    $region29: #{tpu_custom_call.1} parent=1 // pred_fallthru
      _
    // Predicated region
    $region30: #{tpu_custom_call.1} parent=1 // pred_check
      _
    $region31: #{tpu_custom_call.1} parent=1 // pred_check_branch
      %53 = sbr.rel (0) target = $region33
    $region32: #{tpu_custom_call.1} parent=1 // pred_region
      %54 = dma.done [#allocation9], 256
    $region33: #{tpu_custom_call.1} parent=1 // pred_fallthru
      _
    %v56 = vld [vmem:[#allocation5] sm:$0xff]
    %v57 = vld [vmem:[#allocation5 + $0x8] sm:$0xff]
    %vm58 = vcmask 261120
    %v59 = vsel %vm58, %v56, 0.0
    %60 = vadd.xlane.f32.xlu0 %v59
    %v61 = vpop.xlane.xlu0 %60
    %v62 = vsel %vm58, %v57, 0.0
    %63 = vadd.xlane.f32.xlu0 %v62
    %v64 = vpop.xlane.xlu0 %63
    %v65 = vrcp.pop 32.0
    %v66 = vmul.f32 %v61, %v65
    %v67 = vmul.f32 %v64, %v65
    %v68 = vsub.f32 %v56, %v66
    %v69 = vsub.f32 %v57, %v67
    %v70 = vmul.f32 %v68, %v68
    %v71 = vmul.f32 %v69, %v69
    %v72 = vsel %vm58, %v70, 0.0
    %73 = vadd.xlane.f32.xlu0 %v72
    %v74 = vpop.xlane.xlu0 %73
    %v75 = vsel %vm58, %v71, 0.0
    %76 = vadd.xlane.f32.xlu0 %v75
    %v77 = vpop.xlane.xlu0 %76
    %v78 = vrcp.pop 31.0
    %v79 = vmul.f32 %v74, %v78
    %v80 = vmul.f32 %v77, %v78
    %v81 = vrsqrt.pop %v79
    %v82 = vmul.f32 %v79, %v81
    %vm83 = vcmp.eq.f32.partialorder %v79, inf
    %v84 = vsel %vm83, %v79, %v82
    %vm85 = vcmp.eq.f32.partialorder %v79, 0.0
    %v86 = vand.u32 %v79, 2147483648
    %v87 = vsel %vm85, %v86, %v84
    %v88 = vrsqrt.pop %v80
    %v89 = vmul.f32 %v80, %v88
    %vm90 = vcmp.eq.f32.partialorder %v80, inf
    %v91 = vsel %vm90, %v80, %v89
    %vm92 = vcmp.eq.f32.partialorder %v80, 0.0
    %v93 = vand.u32 %v80, 2147483648
    %v94 = vsel %vm92, %v93, %v91
    %s95 = sld [smem:[#allocation3]]
    %v96 = vadd.f32 %v87, 1e-06
    %v97 = vadd.f32 %v94, 1e-06
    %v98 = vstv %s95
    %v99 = vrcp.pop %v96
    %v100 = vmul.f32 %v98, %v99
    %v101 = vrcp.pop %v97
    %v102 = vmul.f32 %v98, %v101
    %v103 = vmul.f32 %v68, %v100
    %v104 = vmul.f32 %v69, %v102
    %s105 = sld [smem:[#allocation4]]
    %v106 = vstv %s105
    %v107 = vadd.f32 %v103, %v106
    %v108 = vadd.f32 %v104, %v106
    %v109 = vpack.c.bf16 %v108, %v107
    %v110 = vld [vmem:[#allocation8] sm:$0xf]
    %v111 = vld [vmem:[#allocation8 + $0x4] sm:$0xf]
    %v112 = vld [vmem:[#allocation8 + $0x8] sm:$0xf]
    %v113 = vld [vmem:[#allocation8 + $0xc] sm:$0xf]
    %v114 = vld [vmem:[%s5] sm:$0x1]
    %v116 = vlaneseq
    %v117 = vshrl.u32 %v116, 7
    %v118 = vsub.s32 0, %v117
    %v119 = vrot.slane %v114, %v118
    %v125 = vunpack.c.l.b16 %v110
    %v126 = vunpack.c.l.b16 %v111
    %v127 = vunpack.c.l.b16 %v112
    %v128 = vunpack.c.l.b16 %v113
    %v129 = vpack.c.b16 %v126, %v125
    %v130 = vpack.c.b16 %v128, %v127
    %v134 = vsel %vm58, %v109, 0
    %136 = vmatprep.subr.bf16.mxu0 0
    %137 = vmatpush1.bf16.msra.mxu0 %v129
    %138 = vmatprep.subr.bf16.mxu0 0
    %139 = vmatpush1.bf16.msra.mxu0 %v130
    %140 = vmatprep.subr.bf16.mxu0 0
    %141 = vmatpush1.bf16.msra.mxu0 0
    %142 = vmatprep.subr.bf16.mxu0 0
    %143 = vmatpush1.bf16.msra.mxu0 0
    %144 = vmatprep.subr.bf16.mxu0 0
    %145 = vmatpush1.bf16.msra.mxu0 0
    %146 = vmatprep.subr.bf16.mxu0 0
    %147 = vmatpush1.bf16.msra.mxu0 0
    %148 = vmatprep.subr.bf16.mxu0 0
    %149 = vmatpush1.bf16.msra.mxu0 0
    %150 = vmatprep.subr.bf16.mxu0 0
    %151 = vmatpush1.bf16.msra.mxu0 0
    %152 = vmatprep.subr.bf16.mxu0 0
    %153 = vmatpush1.bf16.msra.mxu0 0
    %154 = vmatprep.subr.bf16.mxu0 0
    %155 = vmatpush1.bf16.msra.mxu0 0
    %156 = vmatprep.subr.bf16.mxu0 0
    %157 = vmatpush1.bf16.msra.mxu0 0
    %158 = vmatprep.subr.bf16.mxu0 0
    %159 = vmatpush1.bf16.msra.mxu0 0
    %160 = vmatprep.subr.bf16.mxu0 0
    %161 = vmatpush1.bf16.msra.mxu0 0
    %162 = vmatprep.subr.bf16.mxu0 0
    %163 = vmatpush1.bf16.msra.mxu0 0
    %164 = vmatprep.subr.bf16.mxu0 0
    %165 = vmatpush1.bf16.msra.mxu0 0
    %166 = vmatprep.subr.bf16.mxu0 0
    %167 = vmatpush1.bf16.msra.mxu0 0
    %168 = vmatprep.mubr.bf16.mxu0 0
    %169 = vmatmul.mubr.bf16.gmra.mrb[0].mxu0 %v134
    %v170 = vpop.f32.mrb[0].mxu0
    %v171 = vadd.f32 %v119, %v170
    %v172 = vpop.f32.mrb[0].mxu0
    %v173 = vpop.f32.mrb[0].mxu0
    %v174 = vadd.f32 %v119, %v173
    %v175 = vpop.f32.mrb[0].mxu0
    %176 = vdwg.mxu0
    %v177 = vadd.f32 %v56, %v171
    %v178 = vadd.f32 %v57, %v174
    %179 = vst.msk [vmem:[#allocation10] sm:$0xff] %vm58, %v177
    %180 = vst.msk [vmem:[#allocation10 + $0x8] sm:$0xff] %vm58, %v178
    // Predicated region
    $region34: #{tpu_custom_call.1} parent=1 // pred_check
      _
    $region35: #{tpu_custom_call.1} parent=1 // pred_check_branch
      %182 = sbr.rel (0) target = $region37
    $region36: #{tpu_custom_call.1} parent=1 // pred_region
      %s184 = ssub.s32 256, 256
      %185 = vsyncadd [#allocation7], %s184
      %s186 = sshll.u32 [#allocation10], 4
      %s187 = int_to_ptr.vmem [resolvable:$true] %s186
      %192 = dma.vmem_to_hbm [thread:$0]  %s187, 256, %s6, [#allocation7], 128, 128, 8
    $region37: #{tpu_custom_call.1} parent=1 // pred_fallthru
      _
    // Predicated region
    $region38: #{tpu_custom_call.1} parent=1 // pred_check
      _
    $region39: #{tpu_custom_call.1} parent=1 // pred_check_branch
      %194 = sbr.rel (0) target = $region41
    $region40: #{tpu_custom_call.1} parent=1 // pred_region
      %195 = dma.done [#allocation7], 256
    $region41: #{tpu_custom_call.1} parent=1 // pred_fallthru
      _
    %196 = vsyncpa [#allocation6], 1
    %197 = vsyncpa [#allocation9], 1
    %198 = vsyncpa [#allocation7], 1

</llo_original>
